<compile_context>
chip_gen: v6e
topology: v6e:2x2x1
jax: 0.10.0
libtpu: 0.0.40
codegen_flags: <defaults>
</compile_context>

<pallas_src>
import functools

import jax
import jax.numpy as jnp
from jax import lax
from jax.experimental import pallas as pl
from jax.experimental.pallas import tpu as pltpu

NEG_INF = -1e30  # big finite negative -> exp underflows to exactly 0 after max-sub


def _mhsa_kernel(z_ref, wqkv_ref, wout_ref, o_ref, *, num_heads, d_k, causal):
    T = z_ref.shape[1]
    D = z_ref.shape[2]

    # Cast activations to bf16 right at the MXU input; keep f32 accumulation.
    z = z_ref[0].astype(jnp.bfloat16)                                     # (T, D)

    # Fused QKV projection: one large MXU contraction (K = D, N = 3D).
    qkv = jnp.dot(z, wqkv_ref[...], preferred_element_type=jnp.float32)   # (T, 3D) f32

    if causal:
        # Causal mask generated in-kernel (no mask DMA at all).
        row = lax.broadcasted_iota(jnp.int32, (T, T), 0)
        col = lax.broadcasted_iota(jnp.int32, (T, T), 1)
        keep = col <= row                                                 # (T, T)

    scale = jnp.float32(d_k ** -0.5)
    out_acc = jnp.zeros((T, D), jnp.float32)

    # Static loop over heads (H is small and compile-time constant). All ops are
    # 2-D: static lane slices + MXU matmuls, no 3-D transposes.
    for h in range(num_heads):
        q = qkv[:, h * d_k:(h + 1) * d_k].astype(jnp.bfloat16)            # (T, d_k)
        k = qkv[:, D + h * d_k:D + (h + 1) * d_k].astype(jnp.bfloat16)    # (T, d_k)
        v = qkv[:, 2 * D + h * d_k:2 * D + (h + 1) * d_k].astype(jnp.bfloat16)

        # scores = q @ k^T without an explicit transpose: contract last dims.
        s = lax.dot_general(q, k, (((1,), (1,)), ((), ())),
                            preferred_element_type=jnp.float32) * scale   # (T, T)
        if causal:
            s = jnp.where(keep, s, NEG_INF)

        # Softmax over keys in f32; normalize with EUP approx reciprocal.
        s = s - jnp.max(s, axis=-1, keepdims=True)
        p = jnp.exp(s)
        inv_l = pl.reciprocal(jnp.sum(p, axis=-1, keepdims=True), approx=True)
        p = (p * inv_l).astype(jnp.bfloat16)                              # (T, T)

        # (T, Tk) x (Tk, d_k) -> (T, d_k); then fold this head's output-projection
        # contribution directly into the accumulator (avoids merging heads).
        ctx = jnp.dot(p, v, preferred_element_type=jnp.float32).astype(jnp.bfloat16)
        w_h = wout_ref[h * d_k:(h + 1) * d_k, :]                          # (d_k, D) bf16
        out_acc = out_acc + jnp.dot(ctx, w_h, preferred_element_type=jnp.float32)

    # Dropout on attn is identity in eval-mode forward.
    o_ref[0] = out_acc.astype(o_ref.dtype)


def mhsa_block(z, wqkv, wout, *, num_heads, causal=True):
    """Fused multi-head self-attention block. z: (B, T, D); wqkv: (D, 3D); wout: (D, D)."""
    B, T, D = z.shape
    if D % num_heads != 0:
        raise ValueError("D must be divisible by H")
    d_k = D // num_heads
    kern = functools.partial(_mhsa_kernel, num_heads=num_heads, d_k=d_k, causal=causal)

    # Ship weights as bf16: halves weight DMA traffic and VMEM footprint;
    # accumulation inside the kernel stays f32.
    wqkv_bf = wqkv.astype(jnp.bfloat16)
    wout_bf = wout.astype(jnp.bfloat16)

    # TODO(synk): for long sequences, add a query-tile grid axis with a flash-style
    # online-softmax key loop so live VMEM no longer scales as T^2.
    return pl.pallas_call(
        kern,
        out_shape=jax.ShapeDtypeStruct((B, T, D), z.dtype),
        grid=(B,),
        in_specs=[
            pl.BlockSpec((1, T, D), lambda b: (b, 0, 0)),   # per-batch activations
            pl.BlockSpec((D, 3 * D), lambda b: (0, 0)),     # Wqkv (grid-invariant)
            pl.BlockSpec((D, D), lambda b: (0, 0)),         # Wout (grid-invariant)
        ],
        out_specs=pl.BlockSpec((1, T, D), lambda b: (b, 0, 0)),
        compiler_params=pltpu.CompilerParams(
            dimension_semantics=("parallel",),
            vmem_limit_bytes=32 * 1024 * 1024),
    )(z, wqkv_bf, wout_bf)


def mhsa_reference(z, wqkv, wout, *, num_heads, causal=True):
    """Pure-JAX f32 reference matching the PyTorch forward."""
    B, T, D = z.shape
    d_k = D // num_heads
    qkv = z @ wqkv
    q, k, v = jnp.split(qkv, 3, axis=-1)

    def heads(a):
        return a.reshape(B, T, num_heads, d_k).transpose(0, 2, 1, 3)

    q, k, v = heads(q), heads(k), heads(v)
    attn = jnp.einsum('bhqd,bhkd->bhqk', q, k) * (d_k ** -0.5)
    if causal:
        tril = jnp.tril(jnp.ones((T, T), jnp.float32))
        attn = jnp.where(tril == 0, -jnp.inf, attn)
    attn = jax.nn.softmax(attn, axis=-1)
    out = jnp.einsum('bhqk,bhkd->bhqd', attn, v).transpose(0, 2, 1, 3).reshape(B, T, D)
    return out @ wout


if __name__ == "__main__":
    B, T, D, H = 2, 8, 32, 4   # batch, seq (block_size), d_model, heads

    key = jax.random.PRNGKey(0)
    kz, kw1, kw2 = jax.random.split(key, 3)
    z = jax.random.normal(kz, (B, T, D), jnp.float32)
    # Parameter init mirrors the module: normal(std=0.01).
    wqkv = 0.01 * jax.random.normal(kw1, (D, 3 * D), jnp.float32)
    wout = 0.01 * jax.random.normal(kw2, (D, D), jnp.float32)

    ok = True
    for causal in (True, False):   # mask=True (default) and mask=False paths
        out = jax.block_until_ready(mhsa_block(z, wqkv, wout, num_heads=H, causal=causal))
        ref = mhsa_reference(z, wqkv, wout, num_heads=H, causal=causal)
        assert out.shape == (B, T, D)
        rel = float(jnp.max(jnp.abs(out - ref)) / (jnp.max(jnp.abs(ref)) + 1e-12))
        assert rel < 2e-2, f"causal={causal}: relative error {rel}"
        ok = ok and (rel < 2e-2)

    if ok:
        print("KERNEL_OK")
</pallas_src>

<mosaic_0001>
module attributes {stable_mosaic.version = 11 : i64} {
  func.func @_mhsa_kernel(%arg0: i32, %arg1: memref<1x8x32xf32, #tpu.memory_space<vmem>>, %arg2: memref<32x96xbf16, #tpu.memory_space<vmem>>, %arg3: memref<32x32xbf16, #tpu.memory_space<vmem>>, %arg4: memref<1x8x32xf32, #tpu.memory_space<vmem>>) attributes {dimension_semantics = [#tpu.dimension_semantics<parallel>], iteration_bounds = array<i64: 2>, scalar_prefetch = 0 : i64, scratch_operands = 0 : i64, tpu.core_type = #tpu.core_type<tc>, window_params = [{transform_indices = @transform_0, window_bounds = array<i64: 1, 8, 32>}, {pipeline_mode = #tpu.pipeline_mode<synchronous>, transform_indices = @transform_1, window_bounds = array<i64: 32, 96>}, {pipeline_mode = #tpu.pipeline_mode<synchronous>, transform_indices = @transform_2, window_bounds = array<i64: 32, 32>}, {transform_indices = @transform_3, window_bounds = array<i64: 1, 8, 32>}]} {
    %c0 = arith.constant 0 : index
    %c0_0 = arith.constant 0 : index
    %c0_1 = arith.constant 0 : index
    %0 = vector.load %arg1[%c0, %c0_0, %c0_1] : memref<1x8x32xf32, #tpu.memory_space<vmem>>, vector<1x8x32xf32>
    %1 = vector.shape_cast %0 : vector<1x8x32xf32> to vector<8x32xf32>
    %2 = arith.truncf %1 : vector<8x32xf32> to vector<8x32xbf16>
    %c0_2 = arith.constant 0 : index
    %c0_3 = arith.constant 0 : index
    %3 = vector.load %arg2[%c0_2, %c0_3] : memref<32x96xbf16, #tpu.memory_space<vmem>>, vector<32x96xbf16>
    %cst = arith.constant dense<0.000000e+00> : vector<8x96xf32>
    %4 = tpu.matmul %2, %3, %cst {dimension_numbers = #tpu.dot_dimension_numbers<[1], [0], [0], [1], [0, 0, 1, 1], [], []>} : vector<8x32xbf16>, vector<32x96xbf16>, vector<8x96xf32> -> vector<8x96xf32>
    %5 = tpu.iota {dimensions = array<i32: 0>} : vector<8x8xi32>
    %6 = tpu.iota {dimensions = array<i32: 1>} : vector<8x8xi32>
    %7 = arith.cmpi sle, %6, %5 : vector<8x8xi32>
    %cst_4 = arith.constant 0.000000e+00 : f32
    %8 = vector.broadcast %cst_4 : f32 to vector<8x32xf32>
    %9 = vector.extract_strided_slice %4 {offsets = [0, 0], sizes = [8, 8], strides = [1, 1]} : vector<8x96xf32> to vector<8x8xf32>
    %10 = arith.truncf %9 : vector<8x8xf32> to vector<8x8xbf16>
    %11 = vector.extract_strided_slice %4 {offsets = [0, 32], sizes = [8, 8], strides = [1, 1]} : vector<8x96xf32> to vector<8x8xf32>
    %12 = arith.truncf %11 : vector<8x8xf32> to vector<8x8xbf16>
    %13 = vector.extract_strided_slice %4 {offsets = [0, 64], sizes = [8, 8], strides = [1, 1]} : vector<8x96xf32> to vector<8x8xf32>
    %14 = arith.truncf %13 : vector<8x8xf32> to vector<8x8xbf16>
    %cst_5 = arith.constant dense<0.000000e+00> : vector<8x8xf32>
    %15 = tpu.matmul %10, %12, %cst_5 {dimension_numbers = #tpu.dot_dimension_numbers<[1], [1], [0], [0], [0, 0, 1, 0], [], []>} : vector<8x8xbf16>, vector<8x8xbf16>, vector<8x8xf32> -> vector<8x8xf32>
    %cst_6 = arith.constant 0.353553385 : f32
    %16 = vector.broadcast %cst_6 : f32 to vector<8x8xf32>
    %17 = arith.mulf %15, %16 : vector<8x8xf32>
    %cst_7 = arith.constant -1.000000e+30 : f32
    %18 = vector.broadcast %cst_7 : f32 to vector<8x8xf32>
    %19 = arith.select %7, %17, %18 : vector<8x8xi1>, vector<8x8xf32>
    %cst_8 = arith.constant dense<0xFF800000> : vector<8xf32>
    %20 = vector.multi_reduction <maximumf>, %19, %cst_8 [1] : vector<8x8xf32> to vector<8xf32>
    %21 = vector.shape_cast %20 : vector<8xf32> to vector<8x1xf32>
    %22 = vector.broadcast %21 : vector<8x1xf32> to vector<8x8xf32>
    %23 = arith.subf %19, %22 : vector<8x8xf32>
    %24 = math.exp %23 : vector<8x8xf32>
    %cst_9 = arith.constant dense<0.000000e+00> : vector<8xf32>
    %25 = vector.multi_reduction <add>, %24, %cst_9 [1] : vector<8x8xf32> to vector<8xf32>
    %26 = vector.shape_cast %25 : vector<8xf32> to vector<8x1xf32>
    %27 = tpu.reciprocal %26 {approx = true} : vector<8x1xf32> -> vector<8x1xf32>
    %28 = vector.broadcast %27 : vector<8x1xf32> to vector<8x8xf32>
    %29 = arith.mulf %24, %28 : vector<8x8xf32>
    %30 = arith.truncf %29 : vector<8x8xf32> to vector<8x8xbf16>
    %cst_10 = arith.constant dense<0.000000e+00> : vector<8x8xf32>
    %31 = tpu.matmul %30, %14, %cst_10 {dimension_numbers = #tpu.dot_dimension_numbers<[1], [0], [0], [1], [0, 0, 1, 1], [], []>} : vector<8x8xbf16>, vector<8x8xbf16>, vector<8x8xf32> -> vector<8x8xf32>
    %32 = arith.truncf %31 : vector<8x8xf32> to vector<8x8xbf16>
    %c0_11 = arith.constant 0 : index
    %c0_12 = arith.constant 0 : index
    %33 = vector.load %arg3[%c0_11, %c0_12] : memref<32x32xbf16, #tpu.memory_space<vmem>>, vector<8x32xbf16>
    %cst_13 = arith.constant dense<0.000000e+00> : vector<8x32xf32>
    %34 = tpu.matmul %32, %33, %cst_13 {dimension_numbers = #tpu.dot_dimension_numbers<[1], [0], [0], [1], [0, 0, 1, 1], [], []>} : vector<8x8xbf16>, vector<8x32xbf16>, vector<8x32xf32> -> vector<8x32xf32>
    %35 = arith.addf %8, %34 : vector<8x32xf32>
    %36 = vector.extract_strided_slice %4 {offsets = [0, 8], sizes = [8, 8], strides = [1, 1]} : vector<8x96xf32> to vector<8x8xf32>
    %37 = arith.truncf %36 : vector<8x8xf32> to vector<8x8xbf16>
    %38 = vector.extract_strided_slice %4 {offsets = [0, 40], sizes = [8, 8], strides = [1, 1]} : vector<8x96xf32> to vector<8x8xf32>
    %39 = arith.truncf %38 : vector<8x8xf32> to vector<8x8xbf16>
    %40 = vector.extract_strided_slice %4 {offsets = [0, 72], sizes = [8, 8], strides = [1, 1]} : vector<8x96xf32> to vector<8x8xf32>
    %41 = arith.truncf %40 : vector<8x8xf32> to vector<8x8xbf16>
    %cst_14 = arith.constant dense<0.000000e+00> : vector<8x8xf32>
    %42 = tpu.matmul %37, %39, %cst_14 {dimension_numbers = #tpu.dot_dimension_numbers<[1], [1], [0], [0], [0, 0, 1, 0], [], []>} : vector<8x8xbf16>, vector<8x8xbf16>, vector<8x8xf32> -> vector<8x8xf32>
    %cst_15 = arith.constant 0.353553385 : f32
    %43 = vector.broadcast %cst_15 : f32 to vector<8x8xf32>
    %44 = arith.mulf %42, %43 : vector<8x8xf32>
    %cst_16 = arith.constant -1.000000e+30 : f32
    %45 = vector.broadcast %cst_16 : f32 to vector<8x8xf32>
    %46 = arith.select %7, %44, %45 : vector<8x8xi1>, vector<8x8xf32>
    %cst_17 = arith.constant dense<0xFF800000> : vector<8xf32>
    %47 = vector.multi_reduction <maximumf>, %46, %cst_17 [1] : vector<8x8xf32> to vector<8xf32>
    %48 = vector.shape_cast %47 : vector<8xf32> to vector<8x1xf32>
    %49 = vector.broadcast %48 : vector<8x1xf32> to vector<8x8xf32>
    %50 = arith.subf %46, %49 : vector<8x8xf32>
    %51 = math.exp %50 : vector<8x8xf32>
    %cst_18 = arith.constant dense<0.000000e+00> : vector<8xf32>
    %52 = vector.multi_reduction <add>, %51, %cst_18 [1] : vector<8x8xf32> to vector<8xf32>
    %53 = vector.shape_cast %52 : vector<8xf32> to vector<8x1xf32>
    %54 = tpu.reciprocal %53 {approx = true} : vector<8x1xf32> -> vector<8x1xf32>
    %55 = vector.broadcast %54 : vector<8x1xf32> to vector<8x8xf32>
    %56 = arith.mulf %51, %55 : vector<8x8xf32>
    %57 = arith.truncf %56 : vector<8x8xf32> to vector<8x8xbf16>
    %cst_19 = arith.constant dense<0.000000e+00> : vector<8x8xf32>
    %58 = tpu.matmul %57, %41, %cst_19 {dimension_numbers = #tpu.dot_dimension_numbers<[1], [0], [0], [1], [0, 0, 1, 1], [], []>} : vector<8x8xbf16>, vector<8x8xbf16>, vector<8x8xf32> -> vector<8x8xf32>
    %59 = arith.truncf %58 : vector<8x8xf32> to vector<8x8xbf16>
    %c8 = arith.constant 8 : index
    %c0_20 = arith.constant 0 : index
    %60 = vector.load %arg3[%c8, %c0_20] : memref<32x32xbf16, #tpu.memory_space<vmem>>, vector<8x32xbf16>
    %cst_21 = arith.constant dense<0.000000e+00> : vector<8x32xf32>
    %61 = tpu.matmul %59, %60, %cst_21 {dimension_numbers = #tpu.dot_dimension_numbers<[1], [0], [0], [1], [0, 0, 1, 1], [], []>} : vector<8x8xbf16>, vector<8x32xbf16>, vector<8x32xf32> -> vector<8x32xf32>
    %62 = arith.addf %35, %61 : vector<8x32xf32>
    %63 = vector.extract_strided_slice %4 {offsets = [0, 16], sizes = [8, 8], strides = [1, 1]} : vector<8x96xf32> to vector<8x8xf32>
    %64 = arith.truncf %63 : vector<8x8xf32> to vector<8x8xbf16>
    %65 = vector.extract_strided_slice %4 {offsets = [0, 48], sizes = [8, 8], strides = [1, 1]} : vector<8x96xf32> to vector<8x8xf32>
    %66 = arith.truncf %65 : vector<8x8xf32> to vector<8x8xbf16>
    %67 = vector.extract_strided_slice %4 {offsets = [0, 80], sizes = [8, 8], strides = [1, 1]} : vector<8x96xf32> to vector<8x8xf32>
    %68 = arith.truncf %67 : vector<8x8xf32> to vector<8x8xbf16>
    %cst_22 = arith.constant dense<0.000000e+00> : vector<8x8xf32>
    %69 = tpu.matmul %64, %66, %cst_22 {dimension_numbers = #tpu.dot_dimension_numbers<[1], [1], [0], [0], [0, 0, 1, 0], [], []>} : vector<8x8xbf16>, vector<8x8xbf16>, vector<8x8xf32> -> vector<8x8xf32>
    %cst_23 = arith.constant 0.353553385 : f32
    %70 = vector.broadcast %cst_23 : f32 to vector<8x8xf32>
    %71 = arith.mulf %69, %70 : vector<8x8xf32>
    %cst_24 = arith.constant -1.000000e+30 : f32
    %72 = vector.broadcast %cst_24 : f32 to vector<8x8xf32>
    %73 = arith.select %7, %71, %72 : vector<8x8xi1>, vector<8x8xf32>
    %cst_25 = arith.constant dense<0xFF800000> : vector<8xf32>
    %74 = vector.multi_reduction <maximumf>, %73, %cst_25 [1] : vector<8x8xf32> to vector<8xf32>
    %75 = vector.shape_cast %74 : vector<8xf32> to vector<8x1xf32>
    %76 = vector.broadcast %75 : vector<8x1xf32> to vector<8x8xf32>
    %77 = arith.subf %73, %76 : vector<8x8xf32>
    %78 = math.exp %77 : vector<8x8xf32>
    %cst_26 = arith.constant dense<0.000000e+00> : vector<8xf32>
    %79 = vector.multi_reduction <add>, %78, %cst_26 [1] : vector<8x8xf32> to vector<8xf32>
    %80 = vector.shape_cast %79 : vector<8xf32> to vector<8x1xf32>
    %81 = tpu.reciprocal %80 {approx = true} : vector<8x1xf32> -> vector<8x1xf32>
    %82 = vector.broadcast %81 : vector<8x1xf32> to vector<8x8xf32>
    %83 = arith.mulf %78, %82 : vector<8x8xf32>
    %84 = arith.truncf %83 : vector<8x8xf32> to vector<8x8xbf16>
    %cst_27 = arith.constant dense<0.000000e+00> : vector<8x8xf32>
    %85 = tpu.matmul %84, %68, %cst_27 {dimension_numbers = #tpu.dot_dimension_numbers<[1], [0], [0], [1], [0, 0, 1, 1], [], []>} : vector<8x8xbf16>, vector<8x8xbf16>, vector<8x8xf32> -> vector<8x8xf32>
    %86 = arith.truncf %85 : vector<8x8xf32> to vector<8x8xbf16>
    %c16 = arith.constant 16 : index
    %c0_28 = arith.constant 0 : index
    %87 = vector.load %arg3[%c16, %c0_28] : memref<32x32xbf16, #tpu.memory_space<vmem>>, vector<8x32xbf16>
    %cst_29 = arith.constant dense<0.000000e+00> : vector<8x32xf32>
    %88 = tpu.matmul %86, %87, %cst_29 {dimension_numbers = #tpu.dot_dimension_numbers<[1], [0], [0], [1], [0, 0, 1, 1], [], []>} : vector<8x8xbf16>, vector<8x32xbf16>, vector<8x32xf32> -> vector<8x32xf32>
    %89 = arith.addf %62, %88 : vector<8x32xf32>
    %90 = vector.extract_strided_slice %4 {offsets = [0, 24], sizes = [8, 8], strides = [1, 1]} : vector<8x96xf32> to vector<8x8xf32>
    %91 = arith.truncf %90 : vector<8x8xf32> to vector<8x8xbf16>
    %92 = vector.extract_strided_slice %4 {offsets = [0, 56], sizes = [8, 8], strides = [1, 1]} : vector<8x96xf32> to vector<8x8xf32>
    %93 = arith.truncf %92 : vector<8x8xf32> to vector<8x8xbf16>
    %94 = vector.extract_strided_slice %4 {offsets = [0, 88], sizes = [8, 8], strides = [1, 1]} : vector<8x96xf32> to vector<8x8xf32>
    %95 = arith.truncf %94 : vector<8x8xf32> to vector<8x8xbf16>
    %cst_30 = arith.constant dense<0.000000e+00> : vector<8x8xf32>
    %96 = tpu.matmul %91, %93, %cst_30 {dimension_numbers = #tpu.dot_dimension_numbers<[1], [1], [0], [0], [0, 0, 1, 0], [], []>} : vector<8x8xbf16>, vector<8x8xbf16>, vector<8x8xf32> -> vector<8x8xf32>
    %cst_31 = arith.constant 0.353553385 : f32
    %97 = vector.broadcast %cst_31 : f32 to vector<8x8xf32>
    %98 = arith.mulf %96, %97 : vector<8x8xf32>
    %cst_32 = arith.constant -1.000000e+30 : f32
    %99 = vector.broadcast %cst_32 : f32 to vector<8x8xf32>
    %100 = arith.select %7, %98, %99 : vector<8x8xi1>, vector<8x8xf32>
    %cst_33 = arith.constant dense<0xFF800000> : vector<8xf32>
    %101 = vector.multi_reduction <maximumf>, %100, %cst_33 [1] : vector<8x8xf32> to vector<8xf32>
    %102 = vector.shape_cast %101 : vector<8xf32> to vector<8x1xf32>
    %103 = vector.broadcast %102 : vector<8x1xf32> to vector<8x8xf32>
    %104 = arith.subf %100, %103 : vector<8x8xf32>
    %105 = math.exp %104 : vector<8x8xf32>
    %cst_34 = arith.constant dense<0.000000e+00> : vector<8xf32>
    %106 = vector.multi_reduction <add>, %105, %cst_34 [1] : vector<8x8xf32> to vector<8xf32>
    %107 = vector.shape_cast %106 : vector<8xf32> to vector<8x1xf32>
    %108 = tpu.reciprocal %107 {approx = true} : vector<8x1xf32> -> vector<8x1xf32>
    %109 = vector.broadcast %108 : vector<8x1xf32> to vector<8x8xf32>
    %110 = arith.mulf %105, %109 : vector<8x8xf32>
    %111 = arith.truncf %110 : vector<8x8xf32> to vector<8x8xbf16>
    %cst_35 = arith.constant dense<0.000000e+00> : vector<8x8xf32>
    %112 = tpu.matmul %111, %95, %cst_35 {dimension_numbers = #tpu.dot_dimension_numbers<[1], [0], [0], [1], [0, 0, 1, 1], [], []>} : vector<8x8xbf16>, vector<8x8xbf16>, vector<8x8xf32> -> vector<8x8xf32>
    %113 = arith.truncf %112 : vector<8x8xf32> to vector<8x8xbf16>
    %c24 = arith.constant 24 : index
    %c0_36 = arith.constant 0 : index
    %114 = vector.load %arg3[%c24, %c0_36] : memref<32x32xbf16, #tpu.memory_space<vmem>>, vector<8x32xbf16>
    %cst_37 = arith.constant dense<0.000000e+00> : vector<8x32xf32>
    %115 = tpu.matmul %113, %114, %cst_37 {dimension_numbers = #tpu.dot_dimension_numbers<[1], [0], [0], [1], [0, 0, 1, 1], [], []>} : vector<8x8xbf16>, vector<8x32xbf16>, vector<8x32xf32> -> vector<8x32xf32>
    %116 = arith.addf %89, %115 : vector<8x32xf32>
    %c0_38 = arith.constant 0 : index
    %c0_39 = arith.constant 0 : index
    %c0_40 = arith.constant 0 : index
    %117 = vector.load %arg4[%c0_38, %c0_39, %c0_40] : memref<1x8x32xf32, #tpu.memory_space<vmem>>, vector<1x8x32xf32>
    %118 = vector.shape_cast %117 : vector<1x8x32xf32> to vector<8x32xf32>
    %119 = vector.shape_cast %116 : vector<8x32xf32> to vector<1x8x32xf32>
    tpu.vector_store %arg4[%c0_38, %c0_39, %c0_40], %119 {strides = array<i32>} : memref<1x8x32xf32, #tpu.memory_space<vmem>>, vector<1x8x32xf32>,
    return
  }
  func.func @transform_0(%arg0: i32) -> (i32, i32, i32) {
    %c0_i32 = arith.constant 0 : i32
    %c0_i32_0 = arith.constant 0 : i32
    %c0_i32_1 = arith.constant 0 : i32
    return %arg0, %c0_i32, %c0_i32_0 : i32, i32, i32
  }
  func.func @transform_1(%arg0: i32) -> (i32, i32) {
    %c0_i32 = arith.constant 0 : i32
    %c0_i32_0 = arith.constant 0 : i32
    %c0_i32_1 = arith.constant 0 : i32
    return %c0_i32, %c0_i32_0 : i32, i32
  }
  func.func @transform_2(%arg0: i32) -> (i32, i32) {
    %c0_i32 = arith.constant 0 : i32
    %c0_i32_0 = arith.constant 0 : i32
    %c0_i32_1 = arith.constant 0 : i32
    return %c0_i32, %c0_i32_0 : i32, i32
  }
  func.func @transform_3(%arg0: i32) -> (i32, i32, i32) {
    %c0_i32 = arith.constant 0 : i32
    %c0_i32_0 = arith.constant 0 : i32
    %c0_i32_1 = arith.constant 0 : i32
    return %arg0, %c0_i32, %c0_i32_0 : i32, i32, i32
  }
}

</mosaic_0001>

<llo_original>
// kernel: tpu_custom_call.1
$region0: #{tpu_custom_call.1}
  #allocation0 [shape = 'u32[]', space=smem, size = 0x4, offset = 0x4, fixed_abs, tag = 'smem constant byte address 0x4 - core index']
  #allocation1 [shape = 'u32[144,128]{1,0:T(1,128)}', space=vmem, size = 0x12000, scoped, tag = 'internal scratch']
  %s0 = inlined_call_operand.hbm [shape: f32[2,8,32], index: 0, kind: input, shape index: {}]
  %s1 = inlined_call_operand.hbm [shape: bf16[32,96], index: 1, kind: input, shape index: {}]
  %s2 = inlined_call_operand.hbm [shape: bf16[32,32], index: 2, kind: input, shape index: {}]
  %s3 = inlined_call_operand.hbm [shape: f32[2,8,32], index: 3, kind: output, shape index: {}]
  %s4 = sld [smem:[#allocation0]]
  $region57: #{tpu_custom_call.1} parent=0
    _
  %s6 = ssub.s32 1, %s4
  %s7 = scalar_select 0, %s6, %s4
  $region1: #{tpu_custom_call.1} parent=0
    #allocation2 [shape = 'u8[8192]{0}', space=vmem, size = 0x2000, scoped, tag = 'input window, operand 0']
    #allocation3 [shape = 's32[2]{0}', space=sflag, size = 0x8, scoped, tag = 'scoped memory for tpu_custom_call.1']
    #allocation4 [shape = 's32[2]{0}', space=sflag, size = 0x8, scoped, tag = 'scoped memory for tpu_custom_call.1']
    #allocation5 [shape = 'u8[8192]{0}', space=vmem, size = 0x2000, scoped, tag = 'input window, operand 1, single buffered']
    #allocation6 [shape = 's32[1]{0}', space=sflag, size = 0x4, scoped, tag = 'scoped memory for tpu_custom_call.1']
    #allocation7 [shape = 'u8[8192]{0}', space=vmem, size = 0x2000, scoped, tag = 'input window, operand 2, single buffered']
    #allocation8 [shape = 'u8[8192]{0}', space=vmem, size = 0x2000, scoped, tag = 'output window, operand 0']
    %8 = vsyncpa [#allocation3], 0
    %s9 = scalar_lea.sflag [#allocation3], 1
    %10 = vsyncpa %s9, 0
    %11 = vsyncpa [#allocation6], 0
    %12 = vsyncpa [#allocation4], 0
    %s13 = scalar_lea.sflag [#allocation4], 1
    %14 = vsyncpa %s13, 0
    loop: start=0, step=1, limit=4
    $region2: #{tpu_custom_call.1} parent=1 // loop_pre_header
      _
    $region3: #{tpu_custom_call.1} parent=1 // loop_header
      %s16 = sphi 0, %s20
      %p17 = scmp.ge.s32.totalorder %s16, 4
      %s26 = sphi 0, %s28
      %s29 = sphi 0, %s26
      %s30 = sphi 0, %s29
      %s46 = sphi 0, %s30
      %s50 = sphi 0, %s50
      %s52 = sphi 0, %s50
      %s53 = sphi 0, %s52
      %s67 = sphi 0, %s53
      %s71 = sphi 0, %s71
      %s73 = sphi 0, %s71
      %s74 = sphi 0, %s73
      %s88 = sphi 0, %s74
      %s94 = sphi 0, %s96
      %s97 = sphi 0, %s94
      %s98 = sphi 0, %s97
      %s114 = sphi 0, %s98
    $region4: #{tpu_custom_call.1} parent=1 // loop_header_branch
      %19 = sbr.rel (%p17) target = $region8
    $region5: #{tpu_custom_call.1} parent=1 // loop_body
      %s21 = ssub.s32 %s16, 1
      %s22 = ssub.s32 %s16, 2
      %s23 = sadd.s32 %s16, 1
      %s24 = ssub.s32 %s16, %s23
      %p25 = scmp.eq.s32.totalorder %s24, 0
      %s27 = sadd.s32 %s26, 1
      %s28 = scalar_select %p25, %s26, %s27
      %p31 = pneg %p25
      %p32 = scmp.eq.s32.totalorder %s16, 1
      %p33 = por %p31, %p32
      %p34 = scmp.ne.s32.totalorder %s26, %s29
      %p35 = scmp.eq.s32.totalorder %s16, 0
      %p36 = por %p34, %p35
      %p37 = scmp.ne.s32.totalorder %s26, %s29
      %p38 = scmp.eq.s32.totalorder %s21, 1
      %p39 = por %p37, %p38
      %p40 = scmp.ne.s32.totalorder %s29, %s30
      %p41 = scmp.eq.s32.totalorder %s21, 0
      %p42 = por %p40, %p41
      %p43 = scmp.ne.s32.totalorder %s29, %s30
      %p44 = scmp.eq.s32.totalorder %s22, 1
      %p45 = por %p43, %p44
      %p47 = scmp.ne.s32.totalorder %s30, %s46
      %p48 = scmp.eq.s32.totalorder %s22, 0
      %p49 = por %p47, %p48
      %s51 = sadd.s32 %s50, 1
      %p54 = scmp.eq.s32.totalorder %s16, 1
      %p55 = scmp.ne.s32.totalorder %s50, %s52
      %p56 = scmp.eq.s32.totalorder %s16, 0
      %p57 = por %p55, %p56
      %p58 = scmp.ne.s32.totalorder %s50, %s52
      %p59 = scmp.eq.s32.totalorder %s21, 1
      %p60 = por %p58, %p59
      %p61 = scmp.ne.s32.totalorder %s52, %s53
      %p62 = scmp.eq.s32.totalorder %s21, 0
      %p63 = por %p61, %p62
      %p64 = scmp.ne.s32.totalorder %s52, %s53
      %p65 = scmp.eq.s32.totalorder %s22, 1
      %p66 = por %p64, %p65
      %p68 = scmp.ne.s32.totalorder %s53, %s67
      %p69 = scmp.eq.s32.totalorder %s22, 0
      %p70 = por %p68, %p69
      %s72 = sadd.s32 %s71, 1
      %p75 = scmp.eq.s32.totalorder %s16, 1
      %p76 = scmp.ne.s32.totalorder %s71, %s73
      %p77 = scmp.eq.s32.totalorder %s16, 0
      %p78 = por %p76, %p77
      %p79 = scmp.ne.s32.totalorder %s71, %s73
      %p80 = scmp.eq.s32.totalorder %s21, 1
      %p81 = por %p79, %p80
      %p82 = scmp.ne.s32.totalorder %s73, %s74
      %p83 = scmp.eq.s32.totalorder %s21, 0
      %p84 = por %p82, %p83
      %p85 = scmp.ne.s32.totalorder %s73, %s74
      %p86 = scmp.eq.s32.totalorder %s22, 1
      %p87 = por %p85, %p86
      %p89 = scmp.ne.s32.totalorder %s74, %s88
      %p90 = scmp.eq.s32.totalorder %s22, 0
      %p91 = por %p89, %p90
      %s92 = ssub.s32 %s16, %s23
      %p93 = scmp.eq.s32.totalorder %s92, 0
      %s95 = sadd.s32 %s94, 1
      %s96 = scalar_select %p93, %s94, %s95
      %p99 = pneg %p93
      %p100 = scmp.eq.s32.totalorder %s16, 1
      %p101 = por %p99, %p100
      %p102 = scmp.ne.s32.totalorder %s94, %s97
      %p103 = scmp.eq.s32.totalorder %s16, 0
      %p104 = por %p102, %p103
      %p105 = scmp.ne.s32.totalorder %s94, %s97
      %p106 = scmp.eq.s32.totalorder %s21, 1
      %p107 = por %p105, %p106
      %p108 = scmp.ne.s32.totalorder %s97, %s98
      %p109 = scmp.eq.s32.totalorder %s21, 0
      %p110 = por %p108, %p109
      %p111 = scmp.ne.s32.totalorder %s97, %s98
      %p112 = scmp.eq.s32.totalorder %s22, 1
      %p113 = por %p111, %p112
      %p115 = scmp.ne.s32.totalorder %s98, %s114
      %p116 = scmp.eq.s32.totalorder %s22, 0
      %p117 = por %p115, %p116
      %p118 = scmp.le.s32.totalorder 1, %s16
      %p119 = scmp.lt.s32.totalorder %s16, 3
      %p120 = pnand %p118, %p119
      %p121 = pneg %p120
      // Predicated region
      $region9: #{tpu_custom_call.1} parent=5 // pred_check
        _
      $region10: #{tpu_custom_call.1} parent=5 // pred_check_branch
        %123 = sbr.rel (%p120) target = $region12
      $region11: #{tpu_custom_call.1} parent=5 // pred_region
        %s124 = ssub.s32 %s16, 1
        // Predicated region
        $region13: #{tpu_custom_call.1} parent=11 // pred_check
          %p125 = pneg %p63
        $region14: #{tpu_custom_call.1} parent=11 // pred_check_branch
          %127 = sbr.rel (%p125) target = $region16
        $region15: #{tpu_custom_call.1} parent=11 // pred_region
          %s129 = ssub.s32 256, 256
          %130 = vsyncadd [#allocation6], %s129
          %s131 = sshll.u32 [#allocation5], 4
          %s132 = int_to_ptr.vmem [resolvable:$true] %s131
          %137 = dma.hbm_to_vmem [thread:$0]  %s1, 256, %s132, [#allocation6], 64, 64, 4
        $region16: #{tpu_custom_call.1} parent=11 // pred_fallthru
          _
        // Predicated region
        $region17: #{tpu_custom_call.1} parent=11 // pred_check
          %p138 = pneg %p84
        $region18: #{tpu_custom_call.1} parent=11 // pred_check_branch
          %140 = sbr.rel (%p138) target = $region20
        $region19: #{tpu_custom_call.1} parent=11 // pred_region
          %s142 = ssub.s32 256, 256
          %143 = vsyncadd [#allocation6], %s142
          %s144 = sshll.u32 [#allocation7], 4
          %s145 = int_to_ptr.vmem [resolvable:$true] %s144
          %150 = dma.hbm_to_vmem [thread:$0]  %s2, 256, %s145, [#allocation6], 64, 64, 4
        $region20: #{tpu_custom_call.1} parent=11 // pred_fallthru
          _
      $region12: #{tpu_custom_call.1} parent=5 // pred_fallthru
        _
      %p151 = scmp.lt.s32.totalorder %s16, 2
      // Predicated region
      $region21: #{tpu_custom_call.1} parent=5 // pred_check
        %p152 = pneg %p151
      $region22: #{tpu_custom_call.1} parent=5 // pred_check_branch
        %154 = sbr.rel (%p152) target = $region24
      $region23: #{tpu_custom_call.1} parent=5 // pred_region
        // Predicated region
        $region25: #{tpu_custom_call.1} parent=23 // pred_check
          %p155 = pneg %p36
        $region26: #{tpu_custom_call.1} parent=23 // pred_check_branch
          %157 = sbr.rel (%p155) target = $region28
        $region27: #{tpu_custom_call.1} parent=23 // pred_region
          %s158 = sand.u32 %s26, 1
          %s159 = scalar_lea.sflag [#allocation3], %s158
          %s160 = sand.u32 %s26, 1
          %s161 = smul.addr %s160, 8
          %s162 = scalar_lea.vmem [#allocation2], %s161
          %s164 = ssub.s32 128, 128
          %165 = vsyncadd %s159, %s164
          %s166 = smul.addr %s16, 128
          %s167 = scalar_lea.hbm %s0, %s166
          %s169 = sshll.u32 %s162, 4
          %s170 = int_to_ptr.vmem [resolvable:$true] %s169
          %172 = dma.hbm_to_vmem [thread:$0]  %s167, 128, %s170, %s159
        $region28: #{tpu_custom_call.1} parent=23 // pred_fallthru
          _
      $region24: #{tpu_custom_call.1} parent=5 // pred_fallthru
        _
      %p173 = scmp.le.s32.totalorder 1, %s16
      %p174 = scmp.lt.s32.totalorder %s16, 3
      %p175 = pnand %p173, %p174
      %p176 = pneg %p175
      // Predicated region
      $region29: #{tpu_custom_call.1} parent=5 // pred_check
        _
      $region30: #{tpu_custom_call.1} parent=5 // pred_check_branch
        %178 = sbr.rel (%p175) target = $region32
      $region31: #{tpu_custom_call.1} parent=5 // pred_region
        %s179 = ssub.s32 %s16, 1
        %s180 = sand.u32 %s29, 1
        %s181 = scalar_lea.sflag [#allocation3], %s180
        %s182 = sand.u32 %s29, 1
        %s183 = smul.addr %s182, 8
        %s184 = scalar_lea.vmem [#allocation2], %s183
        // Predicated region
        $region33: #{tpu_custom_call.1} parent=31 // pred_check
          %p185 = pneg %p42
        $region34: #{tpu_custom_call.1} parent=31 // pred_check_branch
          %187 = sbr.rel (%p185) target = $region36
        $region35: #{tpu_custom_call.1} parent=31 // pred_region
          %188 = dma.done %s181, 128
        $region36: #{tpu_custom_call.1} parent=31 // pred_fallthru
          _
        // Predicated region
        $region37: #{tpu_custom_call.1} parent=31 // pred_check
          %p189 = pneg %p63
        $region38: #{tpu_custom_call.1} parent=31 // pred_check_branch
          %191 = sbr.rel (%p189) target = $region40
        $region39: #{tpu_custom_call.1} parent=31 // pred_region
          %192 = dma.done [#allocation6], 256
        $region40: #{tpu_custom_call.1} parent=31 // pred_fallthru
          _
        // Predicated region
        $region41: #{tpu_custom_call.1} parent=31 // pred_check
          %p193 = pneg %p84
        $region42: #{tpu_custom_call.1} parent=31 // pred_check_branch
          %195 = sbr.rel (%p193) target = $region44
        $region43: #{tpu_custom_call.1} parent=31 // pred_region
          %196 = dma.done [#allocation6], 256
        $region44: #{tpu_custom_call.1} parent=31 // pred_fallthru
          _
        %s197 = sand.u32 %s29, 1
        %s198 = scalar_lea.sflag [#allocation3], %s197
        %s199 = sand.u32 %s29, 1
        %s200 = smul.addr %s199, 8
        %s201 = scalar_lea.vmem [#allocation2], %s200
        %p202 = pneg %p42
        %p203 = pneg %p39
        %p204 = pneg %p63
        %p205 = pneg %p60
        %p206 = pneg %p84
        %p207 = pneg %p81
        %p208 = pneg %p110
        %p209 = pneg %p107
        %s210 = sand.u32 %s97, 1
        %s211 = scalar_lea.sflag [#allocation4], %s210
        %s212 = sand.u32 %s97, 1
        %s213 = smul.addr %s212, 8
        %s214 = scalar_lea.vmem [#allocation8], %s213
        %v216 = vld [vmem:[%s184] sm:$0xff]
        %v217 = vpack.c.bf16 %v216, %v216
        %v218 = vld [vmem:[#allocation5] sm:$0xf]
        %v219 = vld [vmem:[#allocation5 + $0x4] sm:$0xf]
        %v220 = vld [vmem:[#allocation5 + $0x8] sm:$0xf]
        %v221 = vld [vmem:[#allocation5 + $0xc] sm:$0xf]
        %v226 = vunpack.c.l.b16 %v218
        %v227 = vunpack.c.l.b16 %v219
        %v228 = vunpack.c.l.b16 %v220
        %v229 = vunpack.c.l.b16 %v221
        %v230 = vpack.c.b16 %v227, %v226
        %v231 = vpack.c.b16 %v229, %v228
        %vm234 = vcmask 261120
        %v236 = vsel %vm234, %v217, 0
        %238 = vmatprep.subr.bf16.mxu0 0
        %239 = vmatpush1.bf16.msra.mxu0 0
        %240 = vmatprep.subr.bf16.mxu0 0
        %241 = vmatpush1.bf16.msra.mxu0 0
        %242 = vmatprep.subr.bf16.mxu0 0
        %243 = vmatpush1.bf16.msra.mxu0 0
        %244 = vmatprep.subr.bf16.mxu0 0
        %245 = vmatpush1.bf16.msra.mxu0 0
        %246 = vmatprep.subr.bf16.mxu0 0
        %247 = vmatpush1.bf16.msra.mxu0 0
        %248 = vmatprep.subr.bf16.mxu0 0
        %249 = vmatpush1.bf16.msra.mxu0 0
        %250 = vmatprep.subr.bf16.mxu0 0
        %251 = vmatpush1.bf16.msra.mxu0 %v231
        %252 = vmatprep.subr.bf16.mxu0 0
        %253 = vmatpush1.bf16.msra.mxu0 %v230
        %254 = vmatprep.subr.bf16.mxu0 0
        %255 = vmatpush2.bf16.msra.mxu0 0
        %256 = vmatprep.subr.bf16.mxu0 0
        %257 = vmatpush2.bf16.msra.mxu0 0
        %258 = vmatprep.subr.bf16.mxu0 0
        %259 = vmatpush2.bf16.msra.mxu0 0
        %260 = vmatprep.subr.bf16.mxu0 0
        %261 = vmatpush2.bf16.msra.mxu0 0
        %262 = vmatprep.subr.bf16.mxu0 0
        %263 = vmatpush2.bf16.msra.mxu0 0
        %264 = vmatprep.subr.bf16.mxu0 0
        %265 = vmatpush2.bf16.msra.mxu0 0
        %266 = vmatprep.subr.bf16.mxu0 0
        %267 = vmatpush2.bf16.msra.mxu0 0
        %268 = vmatprep.subr.bf16.mxu0 0
        %269 = vmatpush2.bf16.msra.mxu0 0
        %270 = vmatprep.mubr.bf16.mxu0 0
        %271 = vmatmul.mubr.bf16.gmra.mxu0 %v236
        %v272 = vpop.f32.mrf.mxu0
        %v273 = vadd.f32 0.0, %v272
        %v274 = vpop.f32.mrf.mxu0
        %v275 = vpop.f32.mrf.mxu0
        %v276 = vpop.f32.mrf.mxu0
        %277 = vdwg.mxu0
        %v278 = vlaneseq
        %v279 = vshrl.u32 %v278, 7
        %v280 = vlaneseq
        %v281 = vand.u32 %v280, 127
        %vm282 = vcmp.le.s32.totalorder %v281, %v279
        %v283 = vpack.c.bf16 %v273, %v273
        %285 = vrot.lane.b32.xlu0 %v283, 96
        %v286 = vpop.permute.xlu0 %285
        %vm287 = vcmask 64512
        %v289 = vsel %vm287, %v283, 0
        %v292 = vsel %vm287, %v286, 0
        %294 = vmatprep.subr.bf16.mxu0 0
        %295 = vmatpush1.bf16.xpose.msra.mxu0 0
        %296 = vmatprep.subr.bf16.mxu0 0
        %297 = vmatpush1.bf16.xpose.msra.mxu0 0
        %298 = vmatprep.subr.bf16.mxu0 0
        %299 = vmatpush1.bf16.xpose.msra.mxu0 0
        %300 = vmatprep.subr.bf16.mxu0 0
        %301 = vmatpush1.bf16.xpose.msra.mxu0 0
        %302 = vmatprep.subr.bf16.mxu0 0
        %303 = vmatpush1.bf16.xpose.msra.mxu0 0
        %304 = vmatprep.subr.bf16.mxu0 0
        %305 = vmatpush1.bf16.xpose.msra.mxu0 0
        %306 = vmatprep.subr.bf16.mxu0 0
        %307 = vmatpush1.bf16.xpose.msra.mxu0 0
        %308 = vmatprep.subr.bf16.mxu0 0
        %309 = vmatpush1.bf16.xpose.msra.mxu0 %v292
        %310 = vmatprep.subr.bf16.mxu0 0
        %311 = vmatpush2.bf16.xpose.msra.mxu0 0
        %312 = vmatprep.subr.bf16.mxu0 0
        %313 = vmatpush2.bf16.xpose.msra.mxu0 0
        %314 = vmatprep.subr.bf16.mxu0 0
        %315 = vmatpush2.bf16.xpose.msra.mxu0 0
        %316 = vmatprep.subr.bf16.mxu0 0
        %317 = vmatpush2.bf16.xpose.msra.mxu0 0
        %318 = vmatprep.subr.bf16.mxu0 0
        %319 = vmatpush2.bf16.xpose.msra.mxu0 0
        %320 = vmatprep.subr.bf16.mxu0 0
        %321 = vmatpush2.bf16.xpose.msra.mxu0 0
        %322 = vmatprep.subr.bf16.mxu0 0
        %323 = vmatpush2.bf16.xpose.msra.mxu0 0
        %324 = vmatprep.subr.bf16.mxu0 0
        %325 = vmatpush2.bf16.xpose.msra.mxu0 0
        %326 = vmatprep.mubr.bf16.mxu0 0
        %327 = vmatmul.mubr.bf16.gmra.mxu0 %v289
        %v328 = vpop.f32.mrf.mxu0
        %v329 = vadd.f32 0.0, %v328
        %v330 = vpop.f32.mrf.mxu0
        %v331 = vpop.f32.mrf.mxu0
        %v332 = vpop.f32.mrf.mxu0
        %333 = vdwg.mxu0
        %v334 = vmul.f32 %v329, 0.35355338
        %v335 = vsel %vm282, %v334, -1e+30
        %v336 = vsel %vm287, %v335, -inf
        %337 = vmax.xlane.f32.xlu0 %v336
        %v338 = vpop.xlane.xlu0 %337
        %v339 = vsub.f32 %v335, %v338
        %v340 = vmul.f32 %v339, 1.442695
        %v341 = vpow.pop %v340
        %v342 = vsel %vm287, %v341, 0.0
        %343 = vadd.xlane.f32.xlu0 %v342
        %v344 = vpop.xlane.xlu0 %343
        %v345 = vrcp.pop %v344
        %v346 = vmul.f32 %v341, %v345
        %v347 = vpack.c.bf16 %v346, %v346
        %348 = vrot.lane.b32.xlu0 %v283, 64
        %v349 = vpop.permute.xlu0 %348
        %v351 = vsel %vm287, %v347, 0
        %vm353 = vcmask 1043456
        %v355 = vsel %vm353, %v349, 0
        %357 = vmatprep.subr.bf16.mxu0 0
        %358 = vmatpush1.bf16.msra.mxu0 0
        %359 = vmatprep.subr.bf16.mxu0 0
        %360 = vmatpush1.bf16.msra.mxu0 0
        %361 = vmatprep.subr.bf16.mxu0 0
        %362 = vmatpush1.bf16.msra.mxu0 0
        %363 = vmatprep.subr.bf16.mxu0 0
        %364 = vmatpush1.bf16.msra.mxu0 0
        %365 = vmatprep.subr.bf16.mxu0 0
        %366 = vmatpush1.bf16.msra.mxu0 0
        %367 = vmatprep.subr.bf16.mxu0 0
        %368 = vmatpush1.bf16.msra.mxu0 0
        %369 = vmatprep.subr.bf16.mxu0 0
        %370 = vmatpush1.bf16.msra.mxu0 0
        %371 = vmatprep.subr.bf16.mxu0 0
        %372 = vmatpush1.bf16.msra.mxu0 %v355
        %373 = vmatprep.subr.bf16.mxu0 0
        %374 = vmatpush2.bf16.msra.mxu0 0
        %375 = vmatprep.subr.bf16.mxu0 0
        %376 = vmatpush2.bf16.msra.mxu0 0
        %377 = vmatprep.subr.bf16.mxu0 0
        %378 = vmatpush2.bf16.msra.mxu0 0
        %379 = vmatprep.subr.bf16.mxu0 0
        %380 = vmatpush2.bf16.msra.mxu0 0
        %381 = vmatprep.subr.bf16.mxu0 0
        %382 = vmatpush2.bf16.msra.mxu0 0
        %383 = vmatprep.subr.bf16.mxu0 0
        %384 = vmatpush2.bf16.msra.mxu0 0
        %385 = vmatprep.subr.bf16.mxu0 0
        %386 = vmatpush2.bf16.msra.mxu0 0
        %387 = vmatprep.subr.bf16.mxu0 0
        %388 = vmatpush2.bf16.msra.mxu0 0
        %389 = vmatprep.mubr.bf16.mxu0 0
        %390 = vmatmul.mubr.bf16.gmra.mxu0 %v351
        %v391 = vpop.f32.mrf.mxu0
        %v392 = vadd.f32 0.0, %v391
        %v393 = vpop.f32.mrf.mxu0
        %v394 = vpop.f32.mrf.mxu0
        %v395 = vpop.f32.mrf.mxu0
        %396 = vdwg.mxu0
        %v397 = vpack.c.bf16 %v392, %v392
        %v398 = vld [vmem:[#allocation7] sm:$0xf]
        %399 = vrot.lane.b32.xlu0 %v283, 120
        %v400 = vpop.permute.xlu0 %399
        %401 = vrot.lane.b32.xlu0 %v283, 88
        %v402 = vpop.permute.xlu0 %401
        %v404 = vsel %vm287, %v400, 0
        %v407 = vsel %vm287, %v402, 0
        %409 = vmatprep.subr.bf16.mxu0 0
        %410 = vmatpush1.bf16.xpose.msra.mxu0 0
        %411 = vmatprep.subr.bf16.mxu0 0
        %412 = vmatpush1.bf16.xpose.msra.mxu0 0
        %413 = vmatprep.subr.bf16.mxu0 0
        %414 = vmatpush1.bf16.xpose.msra.mxu0 0
        %415 = vmatprep.subr.bf16.mxu0 0
        %416 = vmatpush1.bf16.xpose.msra.mxu0 0
        %417 = vmatprep.subr.bf16.mxu0 0
        %418 = vmatpush1.bf16.xpose.msra.mxu0 0
        %419 = vmatprep.subr.bf16.mxu0 0
        %420 = vmatpush1.bf16.xpose.msra.mxu0 0
        %421 = vmatprep.subr.bf16.mxu0 0
        %422 = vmatpush1.bf16.xpose.msra.mxu0 0
        %423 = vmatprep.subr.bf16.mxu0 0
        %424 = vmatpush1.bf16.xpose.msra.mxu0 %v407
        %425 = vmatprep.subr.bf16.mxu0 0
        %426 = vmatpush2.bf16.xpose.msra.mxu0 0
        %427 = vmatprep.subr.bf16.mxu0 0
        %428 = vmatpush2.bf16.xpose.msra.mxu0 0
        %429 = vmatprep.subr.bf16.mxu0 0
        %430 = vmatpush2.bf16.xpose.msra.mxu0 0
        %431 = vmatprep.subr.bf16.mxu0 0
        %432 = vmatpush2.bf16.xpose.msra.mxu0 0
        %433 = vmatprep.subr.bf16.mxu0 0
        %434 = vmatpush2.bf16.xpose.msra.mxu0 0
        %435 = vmatprep.subr.bf16.mxu0 0
        %436 = vmatpush2.bf16.xpose.msra.mxu0 0
        %437 = vmatprep.subr.bf16.mxu0 0
        %438 = vmatpush2.bf16.xpose.msra.mxu0 0
        %439 = vmatprep.subr.bf16.mxu0 0
        %440 = vmatpush2.bf16.xpose.msra.mxu0 0
        %441 = vmatprep.mubr.bf16.mxu0 0
        %442 = vmatmul.mubr.bf16.gmra.mxu0 %v404
        %v443 = vpop.f32.mrf.mxu0
        %v444 = vadd.f32 0.0, %v443
        %v445 = vpop.f32.mrf.mxu0
        %v446 = vpop.f32.mrf.mxu0
        %v447 = vpop.f32.mrf.mxu0
        %448 = vdwg.mxu0
        %v449 = vmul.f32 %v444, 0.35355338
        %v450 = vsel %vm282, %v449, -1e+30
        %v451 = vsel %vm287, %v450, -inf
        %452 = vmax.xlane.f32.xlu0 %v451
        %v453 = vpop.xlane.xlu0 %452
        %v454 = vsub.f32 %v450, %v453
        %v455 = vmul.f32 %v454, 1.442695
        %v456 = vpow.pop %v455
        %v457 = vsel %vm287, %v456, 0.0
        %458 = vadd.xlane.f32.xlu0 %v457
        %v459 = vpop.xlane.xlu0 %458
        %v460 = vrcp.pop %v459
        %v461 = vmul.f32 %v456, %v460
        %v462 = vpack.c.bf16 %v461, %v461
        %463 = vrot.lane.b32.xlu0 %v283, 56
        %v464 = vpop.permute.xlu0 %463
        %v466 = vsel %vm287, %v462, 0
        %v469 = vsel %vm353, %v464, 0
        %471 = vmatprep.subr.bf16.mxu0 0
        %472 = vmatpush1.bf16.msra.mxu0 0
        %473 = vmatprep.subr.bf16.mxu0 0
        %474 = vmatpush1.bf16.msra.mxu0 0
        %475 = vmatprep.subr.bf16.mxu0 0
        %476 = vmatpush1.bf16.msra.mxu0 0
        %477 = vmatprep.subr.bf16.mxu0 0
        %478 = vmatpush1.bf16.msra.mxu0 0
        %479 = vmatprep.subr.bf16.mxu0 0
        %480 = vmatpush1.bf16.msra.mxu0 0
        %481 = vmatprep.subr.bf16.mxu0 0
        %482 = vmatpush1.bf16.msra.mxu0 0
        %483 = vmatprep.subr.bf16.mxu0 0
        %484 = vmatpush1.bf16.msra.mxu0 0
        %485 = vmatprep.subr.bf16.mxu0 0
        %486 = vmatpush1.bf16.msra.mxu0 %v469
        %487 = vmatprep.subr.bf16.mxu0 0
        %488 = vmatpush2.bf16.msra.mxu0 0
        %489 = vmatprep.subr.bf16.mxu0 0
        %490 = vmatpush2.bf16.msra.mxu0 0
        %491 = vmatprep.subr.bf16.mxu0 0
        %492 = vmatpush2.bf16.msra.mxu0 0
        %493 = vmatprep.subr.bf16.mxu0 0
        %494 = vmatpush2.bf16.msra.mxu0 0
        %495 = vmatprep.subr.bf16.mxu0 0
        %496 = vmatpush2.bf16.msra.mxu0 0
        %497 = vmatprep.subr.bf16.mxu0 0
        %498 = vmatpush2.bf16.msra.mxu0 0
        %499 = vmatprep.subr.bf16.mxu0 0
        %500 = vmatpush2.bf16.msra.mxu0 0
        %501 = vmatprep.subr.bf16.mxu0 0
        %502 = vmatpush2.bf16.msra.mxu0 0
        %503 = vmatprep.mubr.bf16.mxu0 0
        %504 = vmatmul.mubr.bf16.gmra.mxu0 %v466
        %v505 = vpop.f32.mrf.mxu0
        %v506 = vadd.f32 0.0, %v505
        %v507 = vpop.f32.mrf.mxu0
        %v508 = vpop.f32.mrf.mxu0
        %v509 = vpop.f32.mrf.mxu0
        %510 = vdwg.mxu0
        %v511 = vpack.c.bf16 %v506, %v506
        %v512 = vld [vmem:[#allocation7 + $0x4] sm:$0xf]
        %v514 = vsel %vm287, %v511, 0
        %v517 = vsel %vm353, %v512, 0
        %519 = vmatprep.subr.bf16.mxu0 0
        %520 = vmatpush1.bf16.msra.mxu0 0
        %521 = vmatprep.subr.bf16.mxu0 0
        %522 = vmatpush1.bf16.msra.mxu0 0
        %523 = vmatprep.subr.bf16.mxu0 0
        %524 = vmatpush1.bf16.msra.mxu0 0
        %525 = vmatprep.subr.bf16.mxu0 0
        %526 = vmatpush1.bf16.msra.mxu0 0
        %527 = vmatprep.subr.bf16.mxu0 0
        %528 = vmatpush1.bf16.msra.mxu0 0
        %529 = vmatprep.subr.bf16.mxu0 0
        %530 = vmatpush1.bf16.msra.mxu0 0
        %531 = vmatprep.subr.bf16.mxu0 0
        %532 = vmatpush1.bf16.msra.mxu0 0
        %533 = vmatprep.subr.bf16.mxu0 0
        %534 = vmatpush1.bf16.msra.mxu0 %v517
        %535 = vmatprep.subr.bf16.mxu0 0
        %536 = vmatpush2.bf16.msra.mxu0 0
        %537 = vmatprep.subr.bf16.mxu0 0
        %538 = vmatpush2.bf16.msra.mxu0 0
        %539 = vmatprep.subr.bf16.mxu0 0
        %540 = vmatpush2.bf16.msra.mxu0 0
        %541 = vmatprep.subr.bf16.mxu0 0
        %542 = vmatpush2.bf16.msra.mxu0 0
        %543 = vmatprep.subr.bf16.mxu0 0
        %544 = vmatpush2.bf16.msra.mxu0 0
        %545 = vmatprep.subr.bf16.mxu0 0
        %546 = vmatpush2.bf16.msra.mxu0 0
        %547 = vmatprep.subr.bf16.mxu0 0
        %548 = vmatpush2.bf16.msra.mxu0 0
        %549 = vmatprep.subr.bf16.mxu0 0
        %550 = vmatpush2.bf16.msra.mxu0 0
        %551 = vmatprep.mubr.bf16.mxu0 0
        %552 = vmatmul.mubr.bf16.gmra.mxu0 %v514
        %v553 = vpop.f32.mrf.mxu0
        %v554 = vadd.f32 0.0, %v553
        %v555 = vpop.f32.mrf.mxu0
        %v556 = vpop.f32.mrf.mxu0
        %v557 = vpop.f32.mrf.mxu0
        %558 = vdwg.mxu0
        %v560 = vsel %vm287, %v397, 0
        %v563 = vsel %vm353, %v398, 0
        %565 = vmatprep.subr.bf16.mxu0 0
        %566 = vmatpush1.bf16.msra.mxu0 0
        %567 = vmatprep.subr.bf16.mxu0 0
        %568 = vmatpush1.bf16.msra.mxu0 0
        %569 = vmatprep.subr.bf16.mxu0 0
        %570 = vmatpush1.bf16.msra.mxu0 0
        %571 = vmatprep.subr.bf16.mxu0 0
        %572 = vmatpush1.bf16.msra.mxu0 0
        %573 = vmatprep.subr.bf16.mxu0 0
        %574 = vmatpush1.bf16.msra.mxu0 0
        %575 = vmatprep.subr.bf16.mxu0 0
        %576 = vmatpush1.bf16.msra.mxu0 0
        %577 = vmatprep.subr.bf16.mxu0 0
        %578 = vmatpush1.bf16.msra.mxu0 0
        %579 = vmatprep.subr.bf16.mxu0 0
        %580 = vmatpush1.bf16.msra.mxu0 %v563
        %581 = vmatprep.subr.bf16.mxu0 0
        %582 = vmatpush2.bf16.msra.mxu0 0
        %583 = vmatprep.subr.bf16.mxu0 0
        %584 = vmatpush2.bf16.msra.mxu0 0
        %585 = vmatprep.subr.bf16.mxu0 0
        %586 = vmatpush2.bf16.msra.mxu0 0
        %587 = vmatprep.subr.bf16.mxu0 0
        %588 = vmatpush2.bf16.msra.mxu0 0
        %589 = vmatprep.subr.bf16.mxu0 0
        %590 = vmatpush2.bf16.msra.mxu0 0
        %591 = vmatprep.subr.bf16.mxu0 0
        %592 = vmatpush2.bf16.msra.mxu0 0
        %593 = vmatprep.subr.bf16.mxu0 0
        %594 = vmatpush2.bf16.msra.mxu0 0
        %595 = vmatprep.subr.bf16.mxu0 0
        %596 = vmatpush2.bf16.msra.mxu0 0
        %597 = vmatprep.mubr.bf16.mxu0 0
        %598 = vmatmul.mubr.bf16.gmra.mxu0 %v560
        %v599 = vpop.f32.mrf.mxu0
        %v600 = vadd.f32 %v554, %v599
        %v601 = vpop.f32.mrf.mxu0
        %v602 = vpop.f32.mrf.mxu0
        %v603 = vpop.f32.mrf.mxu0
        %604 = vdwg.mxu0
        %605 = vrot.lane.b32.xlu0 %v283, 112
        %v606 = vpop.permute.xlu0 %605
        %607 = vrot.lane.b32.xlu0 %v283, 80
        %v608 = vpop.permute.xlu0 %607
        %v610 = vsel %vm287, %v606, 0
        %v613 = vsel %vm287, %v608, 0
        %615 = vmatprep.subr.bf16.mxu0 0
        %616 = vmatpush1.bf16.xpose.msra.mxu0 0
        %617 = vmatprep.subr.bf16.mxu0 0
        %618 = vmatpush1.bf16.xpose.msra.mxu0 0
        %619 = vmatprep.subr.bf16.mxu0 0
        %620 = vmatpush1.bf16.xpose.msra.mxu0 0
        %621 = vmatprep.subr.bf16.mxu0 0
        %622 = vmatpush1.bf16.xpose.msra.mxu0 0
        %623 = vmatprep.subr.bf16.mxu0 0
        %624 = vmatpush1.bf16.xpose.msra.mxu0 0
        %625 = vmatprep.subr.bf16.mxu0 0
        %626 = vmatpush1.bf16.xpose.msra.mxu0 0
        %627 = vmatprep.subr.bf16.mxu0 0
        %628 = vmatpush1.bf16.xpose.msra.mxu0 0
        %629 = vmatprep.subr.bf16.mxu0 0
        %630 = vmatpush1.bf16.xpose.msra.mxu0 %v613
        %631 = vmatprep.subr.bf16.mxu0 0
        %632 = vmatpush2.bf16.xpose.msra.mxu0 0
        %633 = vmatprep.subr.bf16.mxu0 0
        %634 = vmatpush2.bf16.xpose.msra.mxu0 0
        %635 = vmatprep.subr.bf16.mxu0 0
        %636 = vmatpush2.bf16.xpose.msra.mxu0 0
        %637 = vmatprep.subr.bf16.mxu0 0
        %638 = vmatpush2.bf16.xpose.msra.mxu0 0
        %639 = vmatprep.subr.bf16.mxu0 0
        %640 = vmatpush2.bf16.xpose.msra.mxu0 0
        %641 = vmatprep.subr.bf16.mxu0 0
        %642 = vmatpush2.bf16.xpose.msra.mxu0 0
        %643 = vmatprep.subr.bf16.mxu0 0
        %644 = vmatpush2.bf16.xpose.msra.mxu0 0
        %645 = vmatprep.subr.bf16.mxu0 0
        %646 = vmatpush2.bf16.xpose.msra.mxu0 0
        %647 = vmatprep.mubr.bf16.mxu0 0
        %648 = vmatmul.mubr.bf16.gmra.mxu0 %v610
        %v649 = vpop.f32.mrf.mxu0
        %v650 = vadd.f32 0.0, %v649
        %v651 = vpop.f32.mrf.mxu0
        %v652 = vpop.f32.mrf.mxu0
        %v653 = vpop.f32.mrf.mxu0
        %654 = vdwg.mxu0
        %v655 = vmul.f32 %v650, 0.35355338
        %v656 = vsel %vm282, %v655, -1e+30
        %v657 = vsel %vm287, %v656, -inf
        %658 = vmax.xlane.f32.xlu0 %v657
        %v659 = vpop.xlane.xlu0 %658
        %v660 = vsub.f32 %v656, %v659
        %v661 = vmul.f32 %v660, 1.442695
        %v662 = vpow.pop %v661
        %v663 = vsel %vm287, %v662, 0.0
        %664 = vadd.xlane.f32.xlu0 %v663
        %v665 = vpop.xlane.xlu0 %664
        %v666 = vrcp.pop %v665
        %v667 = vmul.f32 %v662, %v666
        %v668 = vpack.c.bf16 %v667, %v667
        %669 = vrot.lane.b32.xlu0 %v283, 48
        %v670 = vpop.permute.xlu0 %669
        %v672 = vsel %vm287, %v668, 0
        %v675 = vsel %vm353, %v670, 0
        %677 = vmatprep.subr.bf16.mxu0 0
        %678 = vmatpush1.bf16.msra.mxu0 0
        %679 = vmatprep.subr.bf16.mxu0 0
        %680 = vmatpush1.bf16.msra.mxu0 0
        %681 = vmatprep.subr.bf16.mxu0 0
        %682 = vmatpush1.bf16.msra.mxu0 0
        %683 = vmatprep.subr.bf16.mxu0 0
        %684 = vmatpush1.bf16.msra.mxu0 0
        %685 = vmatprep.subr.bf16.mxu0 0
        %686 = vmatpush1.bf16.msra.mxu0 0
        %687 = vmatprep.subr.bf16.mxu0 0
        %688 = vmatpush1.bf16.msra.mxu0 0
        %689 = vmatprep.subr.bf16.mxu0 0
        %690 = vmatpush1.bf16.msra.mxu0 0
        %691 = vmatprep.subr.bf16.mxu0 0
        %692 = vmatpush1.bf16.msra.mxu0 %v675
        %693 = vmatprep.subr.bf16.mxu0 0
        %694 = vmatpush2.bf16.msra.mxu0 0
        %695 = vmatprep.subr.bf16.mxu0 0
        %696 = vmatpush2.bf16.msra.mxu0 0
        %697 = vmatprep.subr.bf16.mxu0 0
        %698 = vmatpush2.bf16.msra.mxu0 0
        %699 = vmatprep.subr.bf16.mxu0 0
        %700 = vmatpush2.bf16.msra.mxu0 0
        %701 = vmatprep.subr.bf16.mxu0 0
        %702 = vmatpush2.bf16.msra.mxu0 0
        %703 = vmatprep.subr.bf16.mxu0 0
        %704 = vmatpush2.bf16.msra.mxu0 0
        %705 = vmatprep.subr.bf16.mxu0 0
        %706 = vmatpush2.bf16.msra.mxu0 0
        %707 = vmatprep.subr.bf16.mxu0 0
        %708 = vmatpush2.bf16.msra.mxu0 0
        %709 = vmatprep.mubr.bf16.mxu0 0
        %710 = vmatmul.mubr.bf16.gmra.mxu0 %v672
        %v711 = vpop.f32.mrf.mxu0
        %v712 = vadd.f32 0.0, %v711
        %v713 = vpop.f32.mrf.mxu0
        %v714 = vpop.f32.mrf.mxu0
        %v715 = vpop.f32.mrf.mxu0
        %716 = vdwg.mxu0
        %v717 = vpack.c.bf16 %v712, %v712
        %v718 = vld [vmem:[#allocation7 + $0x8] sm:$0xf]
        %v720 = vsel %vm287, %v717, 0
        %v723 = vsel %vm353, %v718, 0
        %725 = vmatprep.subr.bf16.mxu0 0
        %726 = vmatpush1.bf16.msra.mxu0 0
        %727 = vmatprep.subr.bf16.mxu0 0
        %728 = vmatpush1.bf16.msra.mxu0 0
        %729 = vmatprep.subr.bf16.mxu0 0
        %730 = vmatpush1.bf16.msra.mxu0 0
        %731 = vmatprep.subr.bf16.mxu0 0
        %732 = vmatpush1.bf16.msra.mxu0 0
        %733 = vmatprep.subr.bf16.mxu0 0
        %734 = vmatpush1.bf16.msra.mxu0 0
        %735 = vmatprep.subr.bf16.mxu0 0
        %736 = vmatpush1.bf16.msra.mxu0 0
        %737 = vmatprep.subr.bf16.mxu0 0
        %738 = vmatpush1.bf16.msra.mxu0 0
        %739 = vmatprep.subr.bf16.mxu0 0
        %740 = vmatpush1.bf16.msra.mxu0 %v723
        %741 = vmatprep.subr.bf16.mxu0 0
        %742 = vmatpush2.bf16.msra.mxu0 0
        %743 = vmatprep.subr.bf16.mxu0 0
        %744 = vmatpush2.bf16.msra.mxu0 0
        %745 = vmatprep.subr.bf16.mxu0 0
        %746 = vmatpush2.bf16.msra.mxu0 0
        %747 = vmatprep.subr.bf16.mxu0 0
        %748 = vmatpush2.bf16.msra.mxu0 0
        %749 = vmatprep.subr.bf16.mxu0 0
        %750 = vmatpush2.bf16.msra.mxu0 0
        %751 = vmatprep.subr.bf16.mxu0 0
        %752 = vmatpush2.bf16.msra.mxu0 0
        %753 = vmatprep.subr.bf16.mxu0 0
        %754 = vmatpush2.bf16.msra.mxu0 0
        %755 = vmatprep.subr.bf16.mxu0 0
        %756 = vmatpush2.bf16.msra.mxu0 0
        %757 = vmatprep.mubr.bf16.mxu0 0
        %758 = vmatmul.mubr.bf16.gmra.mxu0 %v720
        %v759 = vpop.f32.mrf.mxu0
        %v760 = vadd.f32 0.0, %v759
        %v761 = vpop.f32.mrf.mxu0
        %v762 = vpop.f32.mrf.mxu0
        %v763 = vpop.f32.mrf.mxu0
        %764 = vdwg.mxu0
        %v765 = vadd.f32 %v600, %v760
        %766 = vrot.lane.b32.xlu0 %v283, 104
        %v767 = vpop.permute.xlu0 %766
        %768 = vrot.lane.b32.xlu0 %v283, 72
        %v769 = vpop.permute.xlu0 %768
        %v771 = vsel %vm287, %v767, 0
        %v774 = vsel %vm287, %v769, 0
        %776 = vmatprep.subr.bf16.mxu0 0
        %777 = vmatpush1.bf16.xpose.msra.mxu0 0
        %778 = vmatprep.subr.bf16.mxu0 0
        %779 = vmatpush1.bf16.xpose.msra.mxu0 0
        %780 = vmatprep.subr.bf16.mxu0 0
        %781 = vmatpush1.bf16.xpose.msra.mxu0 0
        %782 = vmatprep.subr.bf16.mxu0 0
        %783 = vmatpush1.bf16.xpose.msra.mxu0 0
        %784 = vmatprep.subr.bf16.mxu0 0
        %785 = vmatpush1.bf16.xpose.msra.mxu0 0
        %786 = vmatprep.subr.bf16.mxu0 0
        %787 = vmatpush1.bf16.xpose.msra.mxu0 0
        %788 = vmatprep.subr.bf16.mxu0 0
        %789 = vmatpush1.bf16.xpose.msra.mxu0 0
        %790 = vmatprep.subr.bf16.mxu0 0
        %791 = vmatpush1.bf16.xpose.msra.mxu0 %v774
        %792 = vmatprep.subr.bf16.mxu0 0
        %793 = vmatpush2.bf16.xpose.msra.mxu0 0
        %794 = vmatprep.subr.bf16.mxu0 0
        %795 = vmatpush2.bf16.xpose.msra.mxu0 0
        %796 = vmatprep.subr.bf16.mxu0 0
        %797 = vmatpush2.bf16.xpose.msra.mxu0 0
        %798 = vmatprep.subr.bf16.mxu0 0
        %799 = vmatpush2.bf16.xpose.msra.mxu0 0
        %800 = vmatprep.subr.bf16.mxu0 0
        %801 = vmatpush2.bf16.xpose.msra.mxu0 0
        %802 = vmatprep.subr.bf16.mxu0 0
        %803 = vmatpush2.bf16.xpose.msra.mxu0 0
        %804 = vmatprep.subr.bf16.mxu0 0
        %805 = vmatpush2.bf16.xpose.msra.mxu0 0
        %806 = vmatprep.subr.bf16.mxu0 0
        %807 = vmatpush2.bf16.xpose.msra.mxu0 0
        %808 = vmatprep.mubr.bf16.mxu0 0
        %809 = vmatmul.mubr.bf16.gmra.mxu0 %v771
        %v810 = vpop.f32.mrf.mxu0
        %v811 = vadd.f32 0.0, %v810
        %v812 = vpop.f32.mrf.mxu0
        %v813 = vpop.f32.mrf.mxu0
        %v814 = vpop.f32.mrf.mxu0
        %815 = vdwg.mxu0
        %v816 = vmul.f32 %v811, 0.35355338
        %v817 = vsel %vm282, %v816, -1e+30
        %v818 = vsel %vm287, %v817, -inf
        %819 = vmax.xlane.f32.xlu0 %v818
        %v820 = vpop.xlane.xlu0 %819
        %v821 = vsub.f32 %v817, %v820
        %v822 = vmul.f32 %v821, 1.442695
        %v823 = vpow.pop %v822
        %v824 = vsel %vm287, %v823, 0.0
        %825 = vadd.xlane.f32.xlu0 %v824
        %v826 = vpop.xlane.xlu0 %825
        %v827 = vrcp.pop %v826
        %v828 = vmul.f32 %v823, %v827
        %v829 = vpack.c.bf16 %v828, %v828
        %830 = vrot.lane.b32.xlu0 %v283, 40
        %v831 = vpop.permute.xlu0 %830
        %v833 = vsel %vm287, %v829, 0
        %v836 = vsel %vm353, %v831, 0
        %838 = vmatprep.subr.bf16.mxu0 0
        %839 = vmatpush1.bf16.msra.mxu0 0
        %840 = vmatprep.subr.bf16.mxu0 0
        %841 = vmatpush1.bf16.msra.mxu0 0
        %842 = vmatprep.subr.bf16.mxu0 0
        %843 = vmatpush1.bf16.msra.mxu0 0
        %844 = vmatprep.subr.bf16.mxu0 0
        %845 = vmatpush1.bf16.msra.mxu0 0
        %846 = vmatprep.subr.bf16.mxu0 0
        %847 = vmatpush1.bf16.msra.mxu0 0
        %848 = vmatprep.subr.bf16.mxu0 0
        %849 = vmatpush1.bf16.msra.mxu0 0
        %850 = vmatprep.subr.bf16.mxu0 0
        %851 = vmatpush1.bf16.msra.mxu0 0
        %852 = vmatprep.subr.bf16.mxu0 0
        %853 = vmatpush1.bf16.msra.mxu0 %v836
        %854 = vmatprep.subr.bf16.mxu0 0
        %855 = vmatpush2.bf16.msra.mxu0 0
        %856 = vmatprep.subr.bf16.mxu0 0
        %857 = vmatpush2.bf16.msra.mxu0 0
        %858 = vmatprep.subr.bf16.mxu0 0
        %859 = vmatpush2.bf16.msra.mxu0 0
        %860 = vmatprep.subr.bf16.mxu0 0
        %861 = vmatpush2.bf16.msra.mxu0 0
        %862 = vmatprep.subr.bf16.mxu0 0
        %863 = vmatpush2.bf16.msra.mxu0 0
        %864 = vmatprep.subr.bf16.mxu0 0
        %865 = vmatpush2.bf16.msra.mxu0 0
        %866 = vmatprep.subr.bf16.mxu0 0
        %867 = vmatpush2.bf16.msra.mxu0 0
        %868 = vmatprep.subr.bf16.mxu0 0
        %869 = vmatpush2.bf16.msra.mxu0 0
        %870 = vmatprep.mubr.bf16.mxu0 0
        %871 = vmatmul.mubr.bf16.gmra.mxu0 %v833
        %v872 = vpop.f32.mrf.mxu0
        %v873 = vadd.f32 0.0, %v872
        %v874 = vpop.f32.mrf.mxu0
        %v875 = vpop.f32.mrf.mxu0
        %v876 = vpop.f32.mrf.mxu0
        %877 = vdwg.mxu0
        %v878 = vpack.c.bf16 %v873, %v873
        %v879 = vld [vmem:[#allocation7 + $0xc] sm:$0xf]
        %v881 = vsel %vm287, %v878, 0
        %v884 = vsel %vm353, %v879, 0
        %886 = vmatprep.subr.bf16.mxu0 0
        %887 = vmatpush1.bf16.msra.mxu0 0
        %888 = vmatprep.subr.bf16.mxu0 0
        %889 = vmatpush1.bf16.msra.mxu0 0
        %890 = vmatprep.subr.bf16.mxu0 0
        %891 = vmatpush1.bf16.msra.mxu0 0
        %892 = vmatprep.subr.bf16.mxu0 0
        %893 = vmatpush1.bf16.msra.mxu0 0
        %894 = vmatprep.subr.bf16.mxu0 0
        %895 = vmatpush1.bf16.msra.mxu0 0
        %896 = vmatprep.subr.bf16.mxu0 0
        %897 = vmatpush1.bf16.msra.mxu0 0
        %898 = vmatprep.subr.bf16.mxu0 0
        %899 = vmatpush1.bf16.msra.mxu0 0
        %900 = vmatprep.subr.bf16.mxu0 0
        %901 = vmatpush1.bf16.msra.mxu0 %v884
        %902 = vmatprep.subr.bf16.mxu0 0
        %903 = vmatpush2.bf16.msra.mxu0 0
        %904 = vmatprep.subr.bf16.mxu0 0
        %905 = vmatpush2.bf16.msra.mxu0 0
        %906 = vmatprep.subr.bf16.mxu0 0
        %907 = vmatpush2.bf16.msra.mxu0 0
        %908 = vmatprep.subr.bf16.mxu0 0
        %909 = vmatpush2.bf16.msra.mxu0 0
        %910 = vmatprep.subr.bf16.mxu0 0
        %911 = vmatpush2.bf16.msra.mxu0 0
        %912 = vmatprep.subr.bf16.mxu0 0
        %913 = vmatpush2.bf16.msra.mxu0 0
        %914 = vmatprep.subr.bf16.mxu0 0
        %915 = vmatpush2.bf16.msra.mxu0 0
        %916 = vmatprep.subr.bf16.mxu0 0
        %917 = vmatpush2.bf16.msra.mxu0 0
        %918 = vmatprep.mubr.bf16.mxu0 0
        %919 = vmatmul.mubr.bf16.gmra.mxu0 %v881
        %v920 = vpop.f32.mrf.mxu0
        %v921 = vadd.f32 0.0, %v920
        %v922 = vpop.f32.mrf.mxu0
        %v923 = vpop.f32.mrf.mxu0
        %v924 = vpop.f32.mrf.mxu0
        %925 = vdwg.mxu0
        %v926 = vadd.f32 %v765, %v921
        %927 = vst.msk [vmem:[%s214] sm:$0xff] %vm234, %v926
        %s928 = sand.u32 %s97, 1
        %s929 = scalar_lea.sflag [#allocation4], %s928
        %s930 = sand.u32 %s97, 1
        %s931 = smul.addr %s930, 8
        %s932 = scalar_lea.vmem [#allocation8], %s931
        // Predicated region
        $region45: #{tpu_custom_call.1} parent=31 // pred_check
          %p933 = pneg %p107
        $region46: #{tpu_custom_call.1} parent=31 // pred_check_branch
          %935 = sbr.rel (%p933) target = $region48
        $region47: #{tpu_custom_call.1} parent=31 // pred_region
          %s937 = ssub.s32 128, 128
          %938 = vsyncadd %s929, %s937
          %s939 = smul.addr %s21, 128
          %s940 = scalar_lea.hbm %s3, %s939
          %s942 = sshll.u32 %s932, 4
          %s943 = int_to_ptr.vmem [resolvable:$true] %s942
          %945 = dma.vmem_to_hbm [thread:$0]  %s943, 128, %s940, %s929
        $region48: #{tpu_custom_call.1} parent=31 // pred_fallthru
          _
      $region32: #{tpu_custom_call.1} parent=5 // pred_fallthru
        _
      %p946 = scmp.le.s32.totalorder 2, %s16
      // Predicated region
      $region49: #{tpu_custom_call.1} parent=5 // pred_check
        %p947 = pneg %p946
      $region50: #{tpu_custom_call.1} parent=5 // pred_check_branch
        %949 = sbr.rel (%p947) target = $region52
      $region51: #{tpu_custom_call.1} parent=5 // pred_region
        %s950 = ssub.s32 %s16, 2
        // Predicated region
        $region53: #{tpu_custom_call.1} parent=51 // pred_check
          %p951 = pneg %p113
        $region54: #{tpu_custom_call.1} parent=51 // pred_check_branch
          %953 = sbr.rel (%p951) target = $region56
        $region55: #{tpu_custom_call.1} parent=51 // pred_region
          %s954 = sand.u32 %s98, 1
          %s955 = scalar_lea.sflag [#allocation4], %s954
          %s956 = sand.u32 %s98, 1
          %s957 = smul.addr %s956, 8
          %s958 = scalar_lea.vmem [#allocation8], %s957
          %959 = dma.done %s955, 128
        $region56: #{tpu_custom_call.1} parent=51 // pred_fallthru
          _
      $region52: #{tpu_custom_call.1} parent=5 // pred_fallthru
        _
    $region6: #{tpu_custom_call.1} parent=1 // loop_footer
      %s20 = sadd.s32 1, %s16
    $region7: #{tpu_custom_call.1} parent=1 // loop_footer_branch
      %15 = sbr.rel target = $region3
    $region8: #{tpu_custom_call.1} parent=1 // loop_exit
      _
    %960 = vsyncpa [#allocation3], 1
    %s961 = scalar_lea.sflag [#allocation3], 1
    %962 = vsyncpa %s961, 1
    %963 = vsyncpa [#allocation6], 1
    %964 = vsyncpa [#allocation4], 1
    %s965 = scalar_lea.sflag [#allocation4], 1
    %966 = vsyncpa %s965, 1

</llo_original>
